<compile_context>
chip_gen: v5e
topology: v5e:2x2
jax: 0.10.0
libtpu: 0.0.40
codegen_flags: <defaults>
</compile_context>

<pallas_src>
import math

import jax
import jax.numpy as jnp
from jax.experimental import pallas as pl
from jax.experimental.pallas import tpu as pltpu

LANE = 128      # f32 lane width
SUBLANE = 8     # f32 sublane count


def _round_up(x, m):
    return ((x + m - 1) // m) * m


def _pad_to(arr, target_shape):
    """Zero-pad trailing edges of `arr` up to `target_shape` (no-op if equal)."""
    pads = [(0, t - s) for s, t in zip(arr.shape, target_shape)]
    if all(p == (0, 0) for p in pads):
        return arr
    return jnp.pad(arr, pads)


def _fit_tile(dim_p, cap, unit):
    """Largest multiple of `unit` that divides dim_p and is <= cap (>= unit)."""
    t = max(min(dim_p, cap), unit)
    t = (t // unit) * unit
    while dim_p % t:
        t -= unit
    return t


# ----------------------------------------------------------------------------
# Kernels
# ----------------------------------------------------------------------------
def _dense_kernel_single(x_ref, w_ref, b_ref, o_ref):
    """Whole problem in one tile: no grid, no accumulator, no predication."""
    o_ref[...] = (jnp.dot(x_ref[...], w_ref[...],
                          preferred_element_type=jnp.float32)
                  + b_ref[...]).astype(o_ref.dtype)


def _dense_kernel_f32(x_ref, w_ref, b_ref, o_ref):
    """Tiled path, f32 output: accumulate directly into the resident out block."""
    k = pl.program_id(2)

    @pl.when(k == 0)
    def _init():
        # Bias-broadcast init replaces both zero-init and the epilogue bias add.
        o_ref[...] = jnp.broadcast_to(b_ref[...], o_ref.shape)

    o_ref[...] += jnp.dot(x_ref[...], w_ref[...],
                          preferred_element_type=jnp.float32)


def _dense_kernel_acc(x_ref, w_ref, b_ref, o_ref, acc_ref):
    """Tiled path, non-f32 output: f32 VMEM accumulator, cast in the epilogue."""
    k = pl.program_id(2)

    @pl.when(k == 0)
    def _init():
        acc_ref[...] = jnp.broadcast_to(b_ref[...], acc_ref.shape).astype(jnp.float32)

    acc_ref[...] += jnp.dot(x_ref[...], w_ref[...],
                            preferred_element_type=jnp.float32)

    @pl.when(k == pl.num_programs(2) - 1)
    def _finish():
        o_ref[...] = acc_ref[...].astype(o_ref.dtype)


# ----------------------------------------------------------------------------
# Host-side wrappers
# ----------------------------------------------------------------------------
def prepare_dense_params(weight, bias):
    """One-time (init-time) parameter prep.

    Pads to hardware granularity and pre-transposes the PyTorch (D_out, D_in)
    weight into a K-on-sublane, lane-dense (D_in_p, D_out_p) layout so no
    per-call padding / transpose / extra HBM pass is ever needed.
    """
    d_out, d_in = weight.shape
    d_in_p = _round_up(d_in, LANE)
    d_out_p = _round_up(d_out, LANE)
    w_t_padded = _pad_to(weight.T, (d_in_p, d_out_p))
    b_padded = _pad_to(bias.reshape(1, d_out), (1, d_out_p))
    return w_t_padded, b_padded, d_out


def dense_forward(x, w_t_padded, b_padded, d_out):
    """Pallas equivalent of Dense.forward: (x @ W.T + b)[..., None, None].

    Args:
      x:          (B, D_in)          float32
      w_t_padded: (D_in_p, D_out_p)  from prepare_dense_params (padded, pre-T)
      b_padded:   (1, D_out_p)       from prepare_dense_params
      d_out:      true output width
    Returns:
      (B, d_out, 1, 1) array, dtype of x.
    """
    B, d_in = x.shape
    d_in_p, d_out_p = w_t_padded.shape
    assert d_in <= d_in_p, "x feature dim exceeds prepared weight"

    B_p = _round_up(B, SUBLANE)
    x_p = _pad_to(x, (B_p, d_in_p))

    # Tile sizes: divisors of the (8/128-granular) padded dims, capped so the
    # double-buffered working set stays well under v7x's 64 MiB physical VMEM.
    tm = _fit_tile(B_p, 512, SUBLANE)
    tn = _fit_tile(d_out_p, 512, LANE)
    tk = _fit_tile(d_in_p, 2048, LANE)

    # v7x has 2 TensorCores sharing the grid via "parallel" axes: keep >= 2
    # blocks on a parallel axis whenever the problem is big enough to split.
    if B_p // tm == 1 and d_out_p // tn == 1:
        if d_out_p >= 2 * LANE:
            tn = _fit_tile(d_out_p, d_out_p // 2, LANE)
        elif B_p >= 2 * SUBLANE:
            tm = _fit_tile(B_p, B_p // 2, SUBLANE)

    grid = (B_p // tm, d_out_p // tn, d_in_p // tk)

    cost = pl.CostEstimate(
        flops=2 * B_p * d_in_p * d_out_p,
        transcendentals=0,
        bytes_accessed=4 * (B_p * d_in_p + d_in_p * d_out_p + d_out_p
                            + B_p * d_out_p),
    )

    if grid == (1, 1, 1):
        # Gridless fast path: tiny problems are pure per-step overhead otherwise.
        out = pl.pallas_call(
            _dense_kernel_single,
            out_shape=jax.ShapeDtypeStruct((B_p, d_out_p), x.dtype),
            in_specs=[pl.BlockSpec(memory_space=pltpu.MemorySpace.VMEM)] * 3,
            out_specs=pl.BlockSpec(memory_space=pltpu.MemorySpace.VMEM),
            cost_estimate=cost,
        )(x_p, w_t_padded, b_padded)
    else:
        direct_f32 = (x.dtype == jnp.float32)
        kernel = _dense_kernel_f32 if direct_f32 else _dense_kernel_acc
        scratch = [] if direct_f32 else [pltpu.VMEM((tm, tn), jnp.float32)]
        out = pl.pallas_call(
            kernel,
            out_shape=jax.ShapeDtypeStruct((B_p, d_out_p), x.dtype),
            grid_spec=pltpu.PrefetchScalarGridSpec(
                num_scalar_prefetch=0,
                grid=grid,
                in_specs=[
                    pl.BlockSpec((tm, tk), lambda i, j, k: (i, k)),   # x tile
                    pl.BlockSpec((tk, tn), lambda i, j, k: (k, j)),   # W.T tile
                    pl.BlockSpec((1, tn), lambda i, j, k: (0, j)),    # bias row
                ],
                out_specs=pl.BlockSpec((tm, tn), lambda i, j, k: (i, j)),
                scratch_shapes=scratch,
            ),
            compiler_params=pltpu.CompilerParams(
                dimension_semantics=("parallel", "parallel", "arbitrary"),
                vmem_limit_bytes=48 * 1024 * 1024,   # safe on v7x's 64 MiB VMEM
            ),
            cost_estimate=cost,
        )(x_p, w_t_padded, b_padded)

    if (B_p, d_out_p) != (B, d_out):
        out = out[:B, :d_out]
    return out[..., None, None]


def init_dense_params(key, input_dim, output_dim):
    """Deterministic init matching nn.Linear's default (uniform +/- 1/sqrt(in))."""
    k_w, k_b = jax.random.split(key)
    bound = 1.0 / math.sqrt(input_dim)
    weight = jax.random.uniform(
        k_w, (output_dim, input_dim), jnp.float32, minval=-bound, maxval=bound)
    bias = jax.random.uniform(
        k_b, (output_dim,), jnp.float32, minval=-bound, maxval=bound)
    return weight, bias


if __name__ == "__main__":
    key = jax.random.PRNGKey(0)
    k_x, k_p, k_x2, k_p2 = jax.random.split(key, 4)

    # --- Toy shape implied by the module (time-embedding projection) --------
    batch, input_dim, output_dim = 2, 32, 64
    x = jax.random.normal(k_x, (batch, input_dim), jnp.float32)
    weight, bias = init_dense_params(k_p, input_dim, output_dim)

    # Hoisted, one-time parameter prep (padding + pre-transpose).
    w_t_p, b_p, d_out = prepare_dense_params(weight, bias)

    y = dense_forward(x, w_t_p, b_p, d_out)
    y = jax.block_until_ready(y)

    y_ref = (x @ weight.T + bias)[..., None, None]
    assert y.shape == (batch, output_dim, 1, 1), y.shape
    assert jnp.allclose(y, y_ref, atol=1e-5, rtol=1e-5)

    # --- Secondary check: exercises the tiled multi-block / multi-K path ----
    b2, di2, do2 = 16, 2304, 384
    x2 = jax.random.normal(k_x2, (b2, di2), jnp.float32)
    w2, bias2 = init_dense_params(k_p2, di2, do2)
    w2_t_p, b2_p, d_out2 = prepare_dense_params(w2, bias2)
    y2 = jax.block_until_ready(dense_forward(x2, w2_t_p, b2_p, d_out2))
    y2_ref = (jnp.dot(x2, w2.T, precision=jax.lax.Precision.HIGHEST)
              + bias2)[..., None, None]
    assert y2.shape == (b2, do2, 1, 1), y2.shape
    assert jnp.allclose(y2, y2_ref, atol=2e-2, rtol=2e-2)

    print("KERNEL_OK")
</pallas_src>

<mosaic_0001>
module attributes {stable_mosaic.version = 11 : i64} {
  func.func @_dense_kernel_single(%arg0: memref<8x128xf32, #tpu.memory_space<vmem>>, %arg1: memref<128x128xf32, #tpu.memory_space<vmem>>, %arg2: memref<1x128xf32, #tpu.memory_space<vmem>>, %arg3: memref<8x128xf32, #tpu.memory_space<vmem>>) attributes {dimension_semantics = [], scalar_prefetch = 0 : i64, scratch_operands = 0 : i64, tpu.core_type = #tpu.core_type<tc>} {
    %c0 = arith.constant 0 : index
    %c0_0 = arith.constant 0 : index
    %0 = vector.load %arg0[%c0, %c0_0] : memref<8x128xf32, #tpu.memory_space<vmem>>, vector<8x128xf32>
    %c0_1 = arith.constant 0 : index
    %c0_2 = arith.constant 0 : index
    %1 = vector.load %arg1[%c0_1, %c0_2] : memref<128x128xf32, #tpu.memory_space<vmem>>, vector<128x128xf32>
    %cst = arith.constant dense<0.000000e+00> : vector<8x128xf32>
    %2 = tpu.matmul %0, %1, %cst {dimension_numbers = #tpu.dot_dimension_numbers<[1], [0], [0], [1], [0, 0, 1, 1], [], []>} : vector<8x128xf32>, vector<128x128xf32>, vector<8x128xf32> -> vector<8x128xf32>
    %c0_3 = arith.constant 0 : index
    %c0_4 = arith.constant 0 : index
    %3 = vector.load %arg2[%c0_3, %c0_4] : memref<1x128xf32, #tpu.memory_space<vmem>>, vector<1x128xf32>
    %4 = vector.broadcast %3 : vector<1x128xf32> to vector<8x128xf32>
    %5 = arith.addf %2, %4 : vector<8x128xf32>
    %c0_5 = arith.constant 0 : index
    %c0_6 = arith.constant 0 : index
    %6 = vector.load %arg3[%c0_5, %c0_6] : memref<8x128xf32, #tpu.memory_space<vmem>>, vector<8x128xf32>
    tpu.vector_store %arg3[%c0_5, %c0_6], %5 {strides = array<i32>} : memref<8x128xf32, #tpu.memory_space<vmem>>, vector<8x128xf32>,
    return
  }
}

</mosaic_0001>

<llo_original>
// kernel: tpu_custom_call.1
$region0: #{tpu_custom_call.1}
  #allocation0 [shape = 'u32[]', space=smem, size = 0x4, offset = 0x4, fixed_abs, tag = 'smem constant byte address 0x4 - core index']
  #allocation1 [shape = 'u32[72,128]{1,0:T(1,128)}', space=vmem, size = 0x9000, scoped, tag = 'internal scratch']
  %s0 = inlined_call_operand.hbm [shape: f32[8,128], index: 0, kind: input, shape index: {}]
  %s1 = inlined_call_operand.hbm [shape: f32[128,128], index: 1, kind: input, shape index: {}]
  %s2 = inlined_call_operand.vmem [shape: f32[1,128], index: 2, kind: input, shape index: {}]
  %s3 = inlined_call_operand.hbm [shape: f32[8,128], index: 3, kind: output, shape index: {}]
  %s4 = sld [smem:[#allocation0]]
  $region30: #{tpu_custom_call.1} parent=0
    _
  %s6 = ssub.s32 1, %s4
  %s7 = scalar_select 0, %s6, %s4
  $region1: #{tpu_custom_call.1} parent=0
    #allocation2 [shape = 'u8[4096]{0}', space=vmem, size = 0x1000, scoped, tag = 'input window, operand 0, single buffered']
    #allocation3 [shape = 's32[1]{0}', space=sflag, size = 0x4, scoped, tag = 'scoped memory for tpu_custom_call.1']
    #allocation4 [shape = 's32[1]{0}', space=sflag, size = 0x4, scoped, tag = 'scoped memory for tpu_custom_call.1']
    #allocation5 [shape = 'u8[65536]{0}', space=vmem, size = 0x10000, scoped, tag = 'input window, operand 1, single buffered']
    #allocation6 [shape = 's32[1]{0}', space=sflag, size = 0x4, scoped, tag = 'scoped memory for tpu_custom_call.1']
    #allocation7 [shape = 'u8[4096]{0}', space=vmem, size = 0x1000, scoped, tag = 'output window, operand 0, single buffered']
    %8 = vsyncpa [#allocation3], 0
    %9 = vsyncpa [#allocation6], 0
    %10 = vsyncpa [#allocation4], 0
    // Predicated region
    $region2: #{tpu_custom_call.1} parent=1 // pred_check
      _
    $region3: #{tpu_custom_call.1} parent=1 // pred_check_branch
      %12 = sbr.rel (0) target = $region5
    $region4: #{tpu_custom_call.1} parent=1 // pred_region
      %14 = vsyncadd [#allocation3], 0
      %s16 = sshll.u32 %s0, 4
      %s17 = int_to_ptr.hbm [resolvable:$true] %s16
      %s18 = sshll.u32 [#allocation2], 4
      %s19 = int_to_ptr.vmem [resolvable:$true] %s18
      %21 = dma.hbm_to_vmem [thread:$0]  %s17, 128, %s19, [#allocation3]
    $region5: #{tpu_custom_call.1} parent=1 // pred_fallthru
      _
    // Predicated region
    $region6: #{tpu_custom_call.1} parent=1 // pred_check
      _
    $region7: #{tpu_custom_call.1} parent=1 // pred_check_branch
      %23 = sbr.rel (0) target = $region9
    $region8: #{tpu_custom_call.1} parent=1 // pred_region
      %25 = vsyncadd [#allocation6], 0
      %s26 = sshll.u32 %s1, 4
      %s27 = int_to_ptr.hbm [resolvable:$true] %s26
      %s28 = sshll.u32 [#allocation5], 4
      %s29 = int_to_ptr.vmem [resolvable:$true] %s28
      %34 = dma.hbm_to_vmem [thread:$0]  %s27, 2048, %s29, [#allocation6], 128, 128, 8
    $region9: #{tpu_custom_call.1} parent=1 // pred_fallthru
      _
    // Predicated region
    $region10: #{tpu_custom_call.1} parent=1 // pred_check
      _
    $region11: #{tpu_custom_call.1} parent=1 // pred_check_branch
      %36 = sbr.rel (0) target = $region13
    $region12: #{tpu_custom_call.1} parent=1 // pred_region
      _
    $region13: #{tpu_custom_call.1} parent=1 // pred_fallthru
      _
    // Predicated region
    $region14: #{tpu_custom_call.1} parent=1 // pred_check
      _
    $region15: #{tpu_custom_call.1} parent=1 // pred_check_branch
      %38 = sbr.rel (0) target = $region17
    $region16: #{tpu_custom_call.1} parent=1 // pred_region
      %40 = dma.done [#allocation3], 128
    $region17: #{tpu_custom_call.1} parent=1 // pred_fallthru
      _
    // Predicated region
    $region18: #{tpu_custom_call.1} parent=1 // pred_check
      _
    $region19: #{tpu_custom_call.1} parent=1 // pred_check_branch
      %42 = sbr.rel (0) target = $region21
    $region20: #{tpu_custom_call.1} parent=1 // pred_region
      %44 = dma.done [#allocation6], 2048
    $region21: #{tpu_custom_call.1} parent=1 // pred_fallthru
      _
    %v45 = vld [vmem:[#allocation2] sm:$0xff]
    %v46 = vld [vmem:[#allocation5] sm:$0xff]
    %v47 = vld [vmem:[#allocation5 + $0x8] sm:$0xff]
    %v48 = vld [vmem:[#allocation5 + $0x10] sm:$0xff]
    %v49 = vld [vmem:[#allocation5 + $0x18] sm:$0xff]
    %v50 = vld [vmem:[#allocation5 + $0x20] sm:$0xff]
    %v51 = vld [vmem:[#allocation5 + $0x28] sm:$0xff]
    %v52 = vld [vmem:[#allocation5 + $0x30] sm:$0xff]
    %v53 = vld [vmem:[#allocation5 + $0x38] sm:$0xff]
    %v54 = vld [vmem:[#allocation5 + $0x40] sm:$0xff]
    %v55 = vld [vmem:[#allocation5 + $0x48] sm:$0xff]
    %v56 = vld [vmem:[#allocation5 + $0x50] sm:$0xff]
    %v57 = vld [vmem:[#allocation5 + $0x58] sm:$0xff]
    %v58 = vld [vmem:[#allocation5 + $0x60] sm:$0xff]
    %v59 = vld [vmem:[#allocation5 + $0x68] sm:$0xff]
    %v60 = vld [vmem:[#allocation5 + $0x70] sm:$0xff]
    %v61 = vld [vmem:[#allocation5 + $0x78] sm:$0xff]
    %v62 = vld [vmem:[%s2] sm:$0x1]
    %v64 = vperm.slane %v62, 0
    %66 = vmatpush.msra.mxu0 %v61
    %67 = vmatpush.msra.mxu0 %v60
    %68 = vmatpush.msra.mxu0 %v59
    %69 = vmatpush.msra.mxu0 %v58
    %70 = vmatpush.msra.mxu0 %v57
    %71 = vmatpush.msra.mxu0 %v56
    %72 = vmatpush.msra.mxu0 %v55
    %73 = vmatpush.msra.mxu0 %v54
    %74 = vmatpush.msra.mxu0 %v53
    %75 = vmatpush.msra.mxu0 %v52
    %76 = vmatpush.msra.mxu0 %v51
    %77 = vmatpush.msra.mxu0 %v50
    %78 = vmatpush.msra.mxu0 %v49
    %79 = vmatpush.msra.mxu0 %v48
    %80 = vmatpush.msra.mxu0 %v47
    %81 = vmatpush.msra.mxu0 %v46
    %82 = vmatmul.f32.gmra.mxu0 %v45
    %v83 = vpop.f32.mrf.mxu0
    %v84 = vadd.f32 %v64, %v83
    %85 = vdwg.mxu0
    %86 = vst [vmem:[#allocation7] sm:$0xff] %v84
    // Predicated region
    $region22: #{tpu_custom_call.1} parent=1 // pred_check
      _
    $region23: #{tpu_custom_call.1} parent=1 // pred_check_branch
      %88 = sbr.rel (0) target = $region25
    $region24: #{tpu_custom_call.1} parent=1 // pred_region
      %90 = vsyncadd [#allocation4], 0
      %s92 = sshll.u32 [#allocation7], 4
      %s93 = int_to_ptr.vmem [resolvable:$true] %s92
      %s94 = sshll.u32 %s3, 4
      %s95 = int_to_ptr.hbm [resolvable:$true] %s94
      %97 = dma.vmem_to_hbm [thread:$0]  %s93, 128, %s95, [#allocation4]
    $region25: #{tpu_custom_call.1} parent=1 // pred_fallthru
      _
    // Predicated region
    $region26: #{tpu_custom_call.1} parent=1 // pred_check
      _
    $region27: #{tpu_custom_call.1} parent=1 // pred_check_branch
      %99 = sbr.rel (0) target = $region29
    $region28: #{tpu_custom_call.1} parent=1 // pred_region
      %101 = dma.done [#allocation4], 128
    $region29: #{tpu_custom_call.1} parent=1 // pred_fallthru
      _
    %102 = vsyncpa [#allocation3], 1
    %103 = vsyncpa [#allocation6], 1
    %104 = vsyncpa [#allocation4], 1

</llo_original>
